<compile_context>
chip_gen: v7x
topology: tpu7x:2x2x1
jax: 0.10.0
libtpu: 0.0.40
codegen_flags: <defaults>
</compile_context>

<pallas_src>
import math

import jax
import jax.numpy as jnp
from jax.experimental import pallas as pl
from jax.experimental.pallas import tpu as pltpu


def _mul_add_batchidx_kernel(x_ref, o_ref):
    # Block = (batch_tile, lane_tile) slice of the (N, feat) view.
    # Row r of this block is batch index  program_id(0)*batch_tile + r.
    batch_tile = x_ref.shape[0]
    b0 = pl.program_id(0) * batch_tile
    bidx = b0 + jax.lax.broadcasted_iota(jnp.int32, x_ref.shape, 0)
    x = x_ref[...]
    if jnp.issubdtype(o_ref.dtype, jnp.floating):
        # f32 compute keeps the integer batch index exact for bf16/fp16 inputs;
        # a single rounding happens at the store.
        res = x.astype(jnp.float32) * 2.0 + bidx.astype(jnp.float32)
        o_ref[...] = res.astype(o_ref.dtype)
    else:
        o_ref[...] = x * 2 + bidx.astype(o_ref.dtype)


def _choose_tiling(n, feat, itemsize):
    """Pick (feat_padded, batch_tile, lane_tile) for the (n, feat) view."""
    target_bytes = 8 * 1024 * 1024          # ~8 MiB blocks: per-step cost <~5%
    sub = max(8, 32 // max(1, itemsize))    # sublane pack: 8 f32, 16 bf16, 32 i8

    # Feature axis: keep it lane-dense.  Pad to a multiple of 128 only when an
    # unpadded full-extent lane block would be too big for VMEM (rare: huge,
    # non-128-multiple feature count).
    if (feat % 128 == 0
            or feat * itemsize * sub <= target_bytes
            or n * feat * itemsize <= target_bytes):
        feat_padded = feat
    else:
        feat_padded = ((feat + 127) // 128) * 128

    max_lane = max(128, (target_bytes // (sub * itemsize)) // 128 * 128)
    if feat_padded % 128 == 0:
        lane_tile = min(feat_padded, max_lane)
    else:
        lane_tile = feat_padded             # small full-extent lane dim

    # Batch axis: as many rows as fit the byte budget, a multiple of `sub`
    # (or the full extent), preferring an exact divisor of n so no block is
    # partial (keeps every DMA uniform and every store unmasked).
    rows_budget = max(1, target_bytes // (lane_tile * itemsize))
    if n <= rows_budget:
        batch_tile = n
    else:
        cap = max(sub, (rows_budget // sub) * sub)
        batch_tile = None
        for bt in range(cap, sub - 1, -sub):
            if n % bt == 0:
                batch_tile = bt
                break
        if batch_tile is None:
            batch_tile = cap                # partial last block; still correct

    # If everything collapsed to a single large block, split it so a v7x
    # megacore can put one block on each TensorCore (harmless on v5e/v6e).
    if (batch_tile == n and lane_tile >= feat_padded
            and n * feat_padded * itemsize >= (4 << 20)):
        if batch_tile % (2 * sub) == 0:
            batch_tile //= 2
        elif lane_tile % 256 == 0:
            lane_tile //= 2

    return feat_padded, batch_tile, lane_tile


def pt_module_forward(x):
    """output = x * 2; output[i] += i  (for each batch index i)."""
    if x.size == 0:
        return x
    n = x.shape[0]
    feat = math.prod(x.shape[1:])
    itemsize = jnp.dtype(x.dtype).itemsize

    feat_padded, batch_tile, lane_tile = _choose_tiling(n, feat, itemsize)

    x2 = x.reshape(n, feat)                 # free reshape of contiguous NCHW
    if feat_padded != feat:
        # Rare path (huge, non-128-multiple feature count): one extra HBM pass,
        # but the VMEM footprint stays bounded by the block size.
        x2 = jnp.pad(x2, ((0, 0), (0, feat_padded - feat)))

    grid = (pl.cdiv(n, batch_tile), pl.cdiv(feat_padded, lane_tile))
    spec = pl.BlockSpec((batch_tile, lane_tile), lambda i, j: (i, j))

    out = pl.pallas_call(
        _mul_add_batchidx_kernel,
        out_shape=jax.ShapeDtypeStruct((n, feat_padded), x.dtype),
        grid=grid,
        in_specs=[spec],
        out_specs=spec,
        compiler_params=pltpu.CompilerParams(
            # Independent blocks, no accumulator: fully parallel grid.
            dimension_semantics=("parallel", "parallel"),
            # 2 in + 2 out double-buffered <=8 MiB blocks ~= 32 MiB; 48 MiB
            # leaves headroom and stays under v7x's 64 MiB physical VMEM.
            vmem_limit_bytes=48 * 1024 * 1024,
        ),
    )(x2)

    if feat_padded != feat:
        out = out[:, :feat]
    return out.reshape(x.shape)


if __name__ == "__main__":
    key = jax.random.PRNGKey(0)
    k1, k2 = jax.random.split(key)

    # Main check: small NCHW shape implied by the module.
    x = jax.random.normal(k1, (2, 4, 16, 16), dtype=jnp.float32)
    out = jax.block_until_ready(pt_module_forward(x))
    bidx = jnp.arange(x.shape[0], dtype=x.dtype).reshape(-1, 1, 1, 1)
    ref = x * 2 + bidx
    assert jnp.allclose(out, ref, atol=1e-6), "mismatch (128-multiple features)"

    # Secondary check: feature count not a multiple of 128 (full-extent lane path).
    y = jax.random.normal(k2, (3, 5, 7, 9), dtype=jnp.float32)
    out_y = jax.block_until_ready(pt_module_forward(y))
    bidx_y = jnp.arange(y.shape[0], dtype=y.dtype).reshape(-1, 1, 1, 1)
    ref_y = y * 2 + bidx_y
    assert jnp.allclose(out_y, ref_y, atol=1e-6), "mismatch (non-128 features)"

    print("KERNEL_OK")
</pallas_src>

<mosaic_0001>
module attributes {stable_mosaic.version = 11 : i64} {
  func.func @_mul_add_batchidx_kernel(%arg0: i32, %arg1: i32, %arg2: memref<2x1024xf32, #tpu.memory_space<vmem>>, %arg3: memref<2x1024xf32, #tpu.memory_space<vmem>>) attributes {dimension_semantics = [#tpu.dimension_semantics<parallel>, #tpu.dimension_semantics<parallel>], iteration_bounds = array<i64: 1, 1>, scalar_prefetch = 0 : i64, scratch_operands = 0 : i64, tpu.core_type = #tpu.core_type<tc>, window_params = [{transform_indices = @transform_0, window_bounds = array<i64: 2, 1024>}, {transform_indices = @transform_1, window_bounds = array<i64: 2, 1024>}]} {
    %c2_i32 = arith.constant 2 : i32
    %0 = arith.muli %arg0, %c2_i32 : i32
    %1 = tpu.iota {dimensions = array<i32: 0>} : vector<2x1024xi32>
    %2 = vector.broadcast %0 : i32 to vector<2x1024xi32>
    %3 = arith.addi %2, %1 : vector<2x1024xi32>
    %c0 = arith.constant 0 : index
    %c0_0 = arith.constant 0 : index
    %4 = vector.load %arg2[%c0, %c0_0] : memref<2x1024xf32, #tpu.memory_space<vmem>>, vector<2x1024xf32>
    %cst = arith.constant 2.000000e+00 : f32
    %5 = vector.broadcast %cst : f32 to vector<2x1024xf32>
    %6 = arith.mulf %4, %5 : vector<2x1024xf32>
    %7 = arith.sitofp %3 : vector<2x1024xi32> to vector<2x1024xf32>
    %8 = arith.addf %6, %7 : vector<2x1024xf32>
    %c0_1 = arith.constant 0 : index
    %c0_2 = arith.constant 0 : index
    %9 = vector.load %arg3[%c0_1, %c0_2] : memref<2x1024xf32, #tpu.memory_space<vmem>>, vector<2x1024xf32>
    tpu.vector_store %arg3[%c0_1, %c0_2], %8 {strides = array<i32>} : memref<2x1024xf32, #tpu.memory_space<vmem>>, vector<2x1024xf32>,
    return
  }
  func.func @transform_0(%arg0: i32, %arg1: i32) -> (i32, i32) {
    %c0_i32 = arith.constant 0 : i32
    return %arg0, %arg1 : i32, i32
  }
  func.func @transform_1(%arg0: i32, %arg1: i32) -> (i32, i32) {
    %c0_i32 = arith.constant 0 : i32
    return %arg0, %arg1 : i32, i32
  }
}

</mosaic_0001>

<llo_original>
// kernel: tpu_custom_call.1
$region0: #{tpu_custom_call.1}
  #allocation0 [shape = 'u32[]', space=smem, size = 0x4, offset = 0x4, fixed_abs, tag = 'smem constant byte address 0x4 - core index']
  #allocation1 [shape = 'u32[144,128]{1,0:T(1,128)}', space=vmem, size = 0x12000, scoped, tag = 'internal scratch']
  %s0 = inlined_call_operand.hbm [shape: f32[2,1024], index: 0, kind: input, shape index: {}]
  %s1 = inlined_call_operand.hbm [shape: f32[2,1024], index: 1, kind: output, shape index: {}]
  %s2 = sld [smem:[#allocation0]]
  $region18: #{tpu_custom_call.1} parent=0
    _
  %s4 = ssub.s32 1, %s2
  %s5 = scalar_select 0, %s4, %s2
  $region1: #{tpu_custom_call.1} parent=0
    #allocation2 [shape = 'u8[8192]{0}', space=vmem, size = 0x2000, scoped, tag = 'input window, operand 0, single buffered']
    #allocation3 [shape = 's32[1]{0}', space=sflag, size = 0x4, scoped, tag = 'scoped memory for tpu_custom_call.1']
    #allocation4 [shape = 's32[1]{0}', space=sflag, size = 0x4, scoped, tag = 'scoped memory for tpu_custom_call.1']
    #allocation5 [shape = 'u8[8192]{0}', space=vmem, size = 0x2000, scoped, tag = 'output window, operand 0, single buffered']
    %6 = vsyncpa [#allocation3], 0
    %7 = vsyncpa [#allocation4], 0
    // Predicated region
    $region2: #{tpu_custom_call.1} parent=1 // pred_check
      _
    $region3: #{tpu_custom_call.1} parent=1 // pred_check_branch
      %9 = sbr.rel (0) target = $region5
    $region4: #{tpu_custom_call.1} parent=1 // pred_region
      %s11 = ssub.s32 256, 256
      %12 = vsyncadd [#allocation3], %s11
      %s14 = sshll.u32 [#allocation2], 4
      %s15 = int_to_ptr.vmem [resolvable:$true] %s14
      %17 = dma.hbm_to_vmem [thread:$0]  %s0, 256, %s15, [#allocation3]
    $region5: #{tpu_custom_call.1} parent=1 // pred_fallthru
      _
    // Predicated region
    $region6: #{tpu_custom_call.1} parent=1 // pred_check
      _
    $region7: #{tpu_custom_call.1} parent=1 // pred_check_branch
      %19 = sbr.rel (0) target = $region9
    $region8: #{tpu_custom_call.1} parent=1 // pred_region
      %20 = dma.done [#allocation3], 256
    $region9: #{tpu_custom_call.1} parent=1 // pred_fallthru
      _
    %s21 = smul.u32 0, 2
    %v22 = vlaneseq
    %v23 = vshrl.u32 %v22, 7
    %v24 = vstv %s21
    %v25 = vadd.s32 %v24, %v23
    %v26 = vld [vmem:[#allocation2] sm:$0xff]
    %v27 = vld [vmem:[#allocation2 + $0x8] sm:$0xff]
    %v28 = vmul.f32 %v26, 2.0
    %v29 = vmul.f32 %v27, 2.0
    %v30 = vcvt.s32.f32 %v25
    %v33 = vunpack.c.l.s4 269488144
    %v34 = vunpack.c.0.s8 %v33
    %v35 = vlaneseq
    %v36 = vshrl.u32 %v35, 7
    %v37 = vsub.s32 %v34, %v36
    %v38 = vrot.slane %v30, %v37
    %v40 = vadd.f32 %v28, %v38
    %v41 = vadd.f32 %v29, %v38
    %42 = vst [vmem:[#allocation5] sm:$0xff] %v40
    %43 = vst [vmem:[#allocation5 + $0x8] sm:$0xff] %v41
    // Predicated region
    $region10: #{tpu_custom_call.1} parent=1 // pred_check
      _
    $region11: #{tpu_custom_call.1} parent=1 // pred_check_branch
      %45 = sbr.rel (0) target = $region13
    $region12: #{tpu_custom_call.1} parent=1 // pred_region
      %s47 = ssub.s32 256, 256
      %48 = vsyncadd [#allocation4], %s47
      %s50 = sshll.u32 [#allocation5], 4
      %s51 = int_to_ptr.vmem [resolvable:$true] %s50
      %53 = dma.vmem_to_hbm [thread:$0]  %s51, 256, %s1, [#allocation4]
    $region13: #{tpu_custom_call.1} parent=1 // pred_fallthru
      _
    // Predicated region
    $region14: #{tpu_custom_call.1} parent=1 // pred_check
      _
    $region15: #{tpu_custom_call.1} parent=1 // pred_check_branch
      %55 = sbr.rel (0) target = $region17
    $region16: #{tpu_custom_call.1} parent=1 // pred_region
      %56 = dma.done [#allocation4], 256
    $region17: #{tpu_custom_call.1} parent=1 // pred_fallthru
      _
    %57 = vsyncpa [#allocation3], 1
    %58 = vsyncpa [#allocation4], 1

</llo_original>
